<compile_context>
chip_gen: v6e
topology: v6e:2x2x1
jax: 0.10.0
libtpu: 0.0.40
codegen_flags: <defaults>
</compile_context>

<pallas_src>
import functools

import jax
import jax.numpy as jnp
from jax.experimental import pallas as pl
from jax.experimental.pallas import tpu as pltpu


def _round_up(x: int, m: int) -> int:
    return ((x + m - 1) // m) * m


# ----------------------------------------------------------------------------- kernels
def _mlp_body(x_ref, w1_ref, b1_ref, w2_ref, b2_ref, w3_ref, b3_ref):
    """Shared fused 3-layer MLP body. Returns f32 activations (TB, Ap)."""
    w1 = w1_ref[...]
    # x arrives as f32; cast to the weight dtype on the VPU (free under the MXU)
    x = x_ref[...].astype(w1.dtype)

    h1 = jnp.dot(x, w1, preferred_element_type=jnp.float32) + b1_ref[...]
    h1 = jnp.maximum(h1, 0.0)

    w2 = w2_ref[...]
    h2 = jnp.dot(h1.astype(w2.dtype), w2, preferred_element_type=jnp.float32) + b2_ref[...]
    h2 = jnp.maximum(h2, 0.0)

    # dropout1: identity in eval mode.
    # TODO(synk): training-mode dropout (p=0.5, 1/(1-p) scaling) would need
    # pltpu.prng_seed + pltpu.prng_random_bits with a per-call seed.
    w3 = w3_ref[...]
    h3 = jnp.dot(h2.astype(w3.dtype), w3, preferred_element_type=jnp.float32) + b3_ref[...]
    h3 = jnp.maximum(h3, 0.0)  # relu3 IS applied after lin3 in the PyTorch forward()
    return h3


def dqn_mlp_kernel(x_ref, w1_ref, b1_ref, w2_ref, b2_ref, w3_ref, b3_ref, o_ref):
    h3 = _mlp_body(x_ref, w1_ref, b1_ref, w2_ref, b2_ref, w3_ref, b3_ref)
    o_ref[...] = h3.astype(o_ref.dtype)


def dqn_greedy_kernel(x_ref, w1_ref, b1_ref, w2_ref, b2_ref, w3_ref, b3_ref, a_ref,
                      *, action_size):
    """Fused consumer for the act() path: argmax over real action lanes only."""
    h3 = _mlp_body(x_ref, w1_ref, b1_ref, w2_ref, b2_ref, w3_ref, b3_ref)
    lane = jax.lax.broadcasted_iota(jnp.int32, h3.shape, 1)
    q = jnp.where(lane < action_size, h3, -jnp.inf)            # mask padded lanes
    q_max = jnp.max(q, axis=-1, keepdims=True)
    idx = jnp.where(q == q_max, lane, h3.shape[-1])            # first-max tie-break
    a_ref[...] = jnp.min(idx, axis=-1, keepdims=True).astype(jnp.int32)


# ----------------------------------------------------------------------------- params
def prepare_params(w1, b1, w2, b2, w3, b3, dtype=jnp.bfloat16):
    """One-time parameter prep (call at init, NOT per forward).

    Casts weights to `dtype` (bf16 recommended: native MXU input, halves weight
    DMA bytes), keeps biases in f32 (added to f32 accumulators), and pads ONLY
    the output lane dim of W3/b3 to a multiple of 128 for a lane-dense store.
    """
    A = w3.shape[1]
    Ap = _round_up(max(A, 128), 128)
    w3p = jnp.zeros((w3.shape[0], Ap), dtype).at[:, :A].set(w3.astype(dtype))
    b3p = jnp.zeros((1, Ap), jnp.float32).at[:, :A].set(b3[None, :].astype(jnp.float32))
    return (
        w1.astype(dtype),
        b1[None, :].astype(jnp.float32),
        w2.astype(dtype),
        b2[None, :].astype(jnp.float32),
        w3p,
        b3p,
    )


# ----------------------------------------------------------------------------- tiling
_MIN_TILE = 16  # 16 sublanes: native bf16 tile height (also fine for f32)


def _batch_tile(B: int, block_b: int):
    """Pick the batch tile TB, grid length, and kernel-side row count Bk."""
    if B <= _MIN_TILE:
        TB = _MIN_TILE                      # single tiny tile (online inference)
    else:
        # Big tiles amortize the ~0.35us/step overhead, but keep >= 2 grid
        # steps so the parallel axis shards across v7x's 2 TensorCores.
        TB = min(block_b, _round_up(pl.cdiv(B, 2), _MIN_TILE))
    Bk = max(B, TB)                         # only B < TB needs padded rows
    grid_b = pl.cdiv(Bk, TB)
    return TB, grid_b, Bk


def _specs(TB, S, H1, H2, Ap):
    return [
        pl.BlockSpec((TB, S), lambda i: (i, 0)),   # x: streamed per batch tile (f32)
        pl.BlockSpec((S, H1), lambda i: (0, 0)),   # weights/biases: VMEM-resident
        pl.BlockSpec((1, H1), lambda i: (0, 0)),
        pl.BlockSpec((H1, H2), lambda i: (0, 0)),
        pl.BlockSpec((1, H2), lambda i: (0, 0)),
        pl.BlockSpec((H2, Ap), lambda i: (0, 0)),
        pl.BlockSpec((1, Ap), lambda i: (0, 0)),
    ]


# ----------------------------------------------------------------------------- wrappers
@functools.partial(
    jax.jit, static_argnames=("action_size", "block_b", "out_dtype", "slice_output")
)
def dqn_forward(x, w1, b1, w2, b2, w3p, b3p, *, action_size, block_b=2048,
                out_dtype=jnp.float32, slice_output=True):
    """Fused DQN forward. Set out_dtype=jnp.bfloat16 to halve writeback bytes,
    or slice_output=False to return the padded (Bk, Ap) buffer (avoids the
    standalone slice pass when this call is folded into a larger jit)."""
    B, S = x.shape
    H1 = w1.shape[1]
    H2 = w2.shape[1]
    Ap = w3p.shape[1]

    TB, grid_b, Bk = _batch_tile(B, block_b)
    xk = x
    if Bk != B:  # only the tiny (B < 16) path pads; large ragged batches use edge clipping
        xk = jnp.pad(x, ((0, Bk - B), (0, 0)))

    out = pl.pallas_call(
        dqn_mlp_kernel,
        out_shape=jax.ShapeDtypeStruct((Bk, Ap), out_dtype),
        grid=(grid_b,),
        in_specs=_specs(TB, S, H1, H2, Ap),
        out_specs=pl.BlockSpec((TB, Ap), lambda i: (i, 0)),
        compiler_params=pltpu.CompilerParams(
            dimension_semantics=("parallel",),   # shards batch tiles across v7x's 2 TCs
        ),
    )(xk, w1, b1, w2, b2, w3p, b3p)

    if slice_output:
        out = out[:B, :action_size]
    return out


@functools.partial(jax.jit, static_argnames=("action_size", "block_b"))
def dqn_greedy_action(x, w1, b1, w2, b2, w3p, b3p, *, action_size, block_b=2048):
    """act() path with the argmax fused into the kernel: writes (B,) int32 only."""
    B, S = x.shape
    H1 = w1.shape[1]
    H2 = w2.shape[1]
    Ap = w3p.shape[1]

    TB, grid_b, Bk = _batch_tile(B, block_b)
    xk = x
    if Bk != B:
        xk = jnp.pad(x, ((0, Bk - B), (0, 0)))

    act = pl.pallas_call(
        functools.partial(dqn_greedy_kernel, action_size=action_size),
        out_shape=jax.ShapeDtypeStruct((Bk, 1), jnp.int32),
        grid=(grid_b,),
        in_specs=_specs(TB, S, H1, H2, Ap),
        out_specs=pl.BlockSpec((TB, 1), lambda i: (i, 0)),
        compiler_params=pltpu.CompilerParams(
            dimension_semantics=("parallel",),
        ),
    )(xk, w1, b1, w2, b2, w3p, b3p)

    return act[:B, 0]
    # TODO(synk): training-loss path could likewise fuse the Q(s,a) gather via
    # PrefetchScalarGridSpec-ed action indices to write only (B, 1).


# ----------------------------------------------------------------------------- reference
def init_linear(key, fan_in, fan_out):
    """PyTorch nn.Linear default init: U(-1/sqrt(fan_in), 1/sqrt(fan_in)).
    Stored transposed vs. PyTorch, i.e. (in, out), so the kernel does x @ W."""
    kw, kb = jax.random.split(key)
    bound = 1.0 / jnp.sqrt(float(fan_in))
    w = jax.random.uniform(kw, (fan_in, fan_out), jnp.float32, -bound, bound)
    b = jax.random.uniform(kb, (fan_out,), jnp.float32, -bound, bound)
    return w, b


def reference_forward(x, w1, b1, w2, b2, w3, b3):
    h1 = jnp.maximum(x @ w1 + b1, 0.0)
    h2 = jnp.maximum(h1 @ w2 + b2, 0.0)
    h3 = jnp.maximum(h2 @ w3 + b3, 0.0)
    return h3


if __name__ == "__main__":
    state_size = 16
    action_size = 8

    key = jax.random.PRNGKey(0)
    kx1, kx2, kx3, k1, k2, k3 = jax.random.split(key, 6)

    w1, b1 = init_linear(k1, state_size, 64)
    w2, b2 = init_linear(k2, 64, 64)
    w3, b3 = init_linear(k3, 64, action_size)

    # --- Path 1: f32 params, tiny online-inference batch (strict check) ---
    params_f32 = prepare_params(w1, b1, w2, b2, w3, b3, dtype=jnp.float32)
    x_small = jax.random.normal(kx1, (2, state_size), jnp.float32)
    out_small = jax.block_until_ready(
        dqn_forward(x_small, *params_f32, action_size=action_size))
    ref_small = reference_forward(x_small, w1, b1, w2, b2, w3, b3)
    assert out_small.shape == (2, action_size), out_small.shape
    assert jnp.allclose(out_small, ref_small, atol=1e-5, rtol=1e-5), (out_small, ref_small)

    # --- Path 2: bf16 params + bf16 output, replay-sized batch (2 grid steps) ---
    params_bf16 = prepare_params(w1, b1, w2, b2, w3, b3, dtype=jnp.bfloat16)
    x_big = jax.random.normal(kx2, (512, state_size), jnp.float32)
    out_big = jax.block_until_ready(
        dqn_forward(x_big, *params_bf16, action_size=action_size,
                    out_dtype=jnp.bfloat16))
    ref_big = reference_forward(x_big, w1, b1, w2, b2, w3, b3)
    assert out_big.shape == (512, action_size), out_big.shape
    assert jnp.allclose(out_big.astype(jnp.float32), ref_big, atol=5e-2, rtol=5e-2), (
        jnp.max(jnp.abs(out_big.astype(jnp.float32) - ref_big)))

    # --- Path 3: ragged batch — tail block handled by Pallas edge clipping, no jnp.pad ---
    x_rag = jax.random.normal(kx3, (300, state_size), jnp.float32)
    out_rag = jax.block_until_ready(
        dqn_forward(x_rag, *params_bf16, action_size=action_size))
    ref_rag = reference_forward(x_rag, w1, b1, w2, b2, w3, b3)
    assert out_rag.shape == (300, action_size), out_rag.shape
    assert jnp.allclose(out_rag, ref_rag, atol=5e-2, rtol=5e-2), (
        jnp.max(jnp.abs(out_rag - ref_rag)))

    # --- Path 4: fused argmax consumer (act() path) ---
    act = jax.block_until_ready(
        dqn_greedy_action(x_big, *params_bf16, action_size=action_size))
    q_big = dqn_forward(x_big, *params_bf16, action_size=action_size)  # f32 Q values
    assert act.shape == (512,), act.shape
    assert jnp.array_equal(act, jnp.argmax(q_big, axis=-1)), "greedy-action mismatch"

    print("KERNEL_OK")
</pallas_src>

<mosaic_0001>
module attributes {stable_mosaic.version = 11 : i64} {
  func.func @dqn_mlp_kernel(%arg0: i32, %arg1: memref<16x16xf32, #tpu.memory_space<vmem>>, %arg2: memref<16x64xf32, #tpu.memory_space<vmem>>, %arg3: memref<1x64xf32, #tpu.memory_space<vmem>>, %arg4: memref<64x64xf32, #tpu.memory_space<vmem>>, %arg5: memref<1x64xf32, #tpu.memory_space<vmem>>, %arg6: memref<64x128xf32, #tpu.memory_space<vmem>>, %arg7: memref<1x128xf32, #tpu.memory_space<vmem>>, %arg8: memref<16x128xf32, #tpu.memory_space<vmem>>) attributes {dimension_semantics = [#tpu.dimension_semantics<parallel>], iteration_bounds = array<i64: 1>, scalar_prefetch = 0 : i64, scratch_operands = 0 : i64, tpu.core_type = #tpu.core_type<tc>, window_params = [{transform_indices = @transform_0, window_bounds = array<i64: 16, 16>}, {pipeline_mode = #tpu.pipeline_mode<synchronous>, transform_indices = @transform_1, window_bounds = array<i64: 16, 64>}, {pipeline_mode = #tpu.pipeline_mode<synchronous>, transform_indices = @transform_2, window_bounds = array<i64: 1, 64>}, {pipeline_mode = #tpu.pipeline_mode<synchronous>, transform_indices = @transform_3, window_bounds = array<i64: 64, 64>}, {pipeline_mode = #tpu.pipeline_mode<synchronous>, transform_indices = @transform_4, window_bounds = array<i64: 1, 64>}, {pipeline_mode = #tpu.pipeline_mode<synchronous>, transform_indices = @transform_5, window_bounds = array<i64: 64, 128>}, {pipeline_mode = #tpu.pipeline_mode<synchronous>, transform_indices = @transform_6, window_bounds = array<i64: 1, 128>}, {transform_indices = @transform_7, window_bounds = array<i64: 16, 128>}]} {
    %c0 = arith.constant 0 : index
    %c0_0 = arith.constant 0 : index
    %0 = vector.load %arg2[%c0, %c0_0] : memref<16x64xf32, #tpu.memory_space<vmem>>, vector<16x64xf32>
    %c0_1 = arith.constant 0 : index
    %c0_2 = arith.constant 0 : index
    %1 = vector.load %arg1[%c0_1, %c0_2] : memref<16x16xf32, #tpu.memory_space<vmem>>, vector<16x16xf32>
    %cst = arith.constant dense<0.000000e+00> : vector<16x64xf32>
    %2 = tpu.matmul %1, %0, %cst {dimension_numbers = #tpu.dot_dimension_numbers<[1], [0], [0], [1], [0, 0, 1, 1], [], []>} : vector<16x16xf32>, vector<16x64xf32>, vector<16x64xf32> -> vector<16x64xf32>
    %c0_3 = arith.constant 0 : index
    %c0_4 = arith.constant 0 : index
    %3 = vector.load %arg3[%c0_3, %c0_4] : memref<1x64xf32, #tpu.memory_space<vmem>>, vector<1x64xf32>
    %4 = vector.broadcast %3 : vector<1x64xf32> to vector<16x64xf32>
    %5 = arith.addf %2, %4 : vector<16x64xf32>
    %cst_5 = arith.constant 0.000000e+00 : f32
    %6 = vector.broadcast %cst_5 : f32 to vector<16x64xf32>
    %7 = arith.maximumf %5, %6 : vector<16x64xf32>
    %c0_6 = arith.constant 0 : index
    %c0_7 = arith.constant 0 : index
    %8 = vector.load %arg4[%c0_6, %c0_7] : memref<64x64xf32, #tpu.memory_space<vmem>>, vector<64x64xf32>
    %cst_8 = arith.constant dense<0.000000e+00> : vector<16x64xf32>
    %9 = tpu.matmul %7, %8, %cst_8 {dimension_numbers = #tpu.dot_dimension_numbers<[1], [0], [0], [1], [0, 0, 1, 1], [], []>} : vector<16x64xf32>, vector<64x64xf32>, vector<16x64xf32> -> vector<16x64xf32>
    %c0_9 = arith.constant 0 : index
    %c0_10 = arith.constant 0 : index
    %10 = vector.load %arg5[%c0_9, %c0_10] : memref<1x64xf32, #tpu.memory_space<vmem>>, vector<1x64xf32>
    %11 = vector.broadcast %10 : vector<1x64xf32> to vector<16x64xf32>
    %12 = arith.addf %9, %11 : vector<16x64xf32>
    %cst_11 = arith.constant 0.000000e+00 : f32
    %13 = vector.broadcast %cst_11 : f32 to vector<16x64xf32>
    %14 = arith.maximumf %12, %13 : vector<16x64xf32>
    %c0_12 = arith.constant 0 : index
    %c0_13 = arith.constant 0 : index
    %15 = vector.load %arg6[%c0_12, %c0_13] : memref<64x128xf32, #tpu.memory_space<vmem>>, vector<64x128xf32>
    %cst_14 = arith.constant dense<0.000000e+00> : vector<16x128xf32>
    %16 = tpu.matmul %14, %15, %cst_14 {dimension_numbers = #tpu.dot_dimension_numbers<[1], [0], [0], [1], [0, 0, 1, 1], [], []>} : vector<16x64xf32>, vector<64x128xf32>, vector<16x128xf32> -> vector<16x128xf32>
    %c0_15 = arith.constant 0 : index
    %c0_16 = arith.constant 0 : index
    %17 = vector.load %arg7[%c0_15, %c0_16] : memref<1x128xf32, #tpu.memory_space<vmem>>, vector<1x128xf32>
    %18 = vector.broadcast %17 : vector<1x128xf32> to vector<16x128xf32>
    %19 = arith.addf %16, %18 : vector<16x128xf32>
    %cst_17 = arith.constant 0.000000e+00 : f32
    %20 = vector.broadcast %cst_17 : f32 to vector<16x128xf32>
    %21 = arith.maximumf %19, %20 : vector<16x128xf32>
    %c0_18 = arith.constant 0 : index
    %c0_19 = arith.constant 0 : index
    %22 = vector.load %arg8[%c0_18, %c0_19] : memref<16x128xf32, #tpu.memory_space<vmem>>, vector<16x128xf32>
    tpu.vector_store %arg8[%c0_18, %c0_19], %21 {strides = array<i32>} : memref<16x128xf32, #tpu.memory_space<vmem>>, vector<16x128xf32>,
    return
  }
  func.func @transform_0(%arg0: i32) -> (i32, i32) {
    %c0_i32 = arith.constant 0 : i32
    %c0_i32_0 = arith.constant 0 : i32
    return %arg0, %c0_i32 : i32, i32
  }
  func.func @transform_1(%arg0: i32) -> (i32, i32) {
    %c0_i32 = arith.constant 0 : i32
    %c0_i32_0 = arith.constant 0 : i32
    %c0_i32_1 = arith.constant 0 : i32
    return %c0_i32, %c0_i32_0 : i32, i32
  }
  func.func @transform_2(%arg0: i32) -> (i32, i32) {
    %c0_i32 = arith.constant 0 : i32
    %c0_i32_0 = arith.constant 0 : i32
    %c0_i32_1 = arith.constant 0 : i32
    return %c0_i32, %c0_i32_0 : i32, i32
  }
  func.func @transform_3(%arg0: i32) -> (i32, i32) {
    %c0_i32 = arith.constant 0 : i32
    %c0_i32_0 = arith.constant 0 : i32
    %c0_i32_1 = arith.constant 0 : i32
    return %c0_i32, %c0_i32_0 : i32, i32
  }
  func.func @transform_4(%arg0: i32) -> (i32, i32) {
    %c0_i32 = arith.constant 0 : i32
    %c0_i32_0 = arith.constant 0 : i32
    %c0_i32_1 = arith.constant 0 : i32
    return %c0_i32, %c0_i32_0 : i32, i32
  }
  func.func @transform_5(%arg0: i32) -> (i32, i32) {
    %c0_i32 = arith.constant 0 : i32
    %c0_i32_0 = arith.constant 0 : i32
    %c0_i32_1 = arith.constant 0 : i32
    return %c0_i32, %c0_i32_0 : i32, i32
  }
  func.func @transform_6(%arg0: i32) -> (i32, i32) {
    %c0_i32 = arith.constant 0 : i32
    %c0_i32_0 = arith.constant 0 : i32
    %c0_i32_1 = arith.constant 0 : i32
    return %c0_i32, %c0_i32_0 : i32, i32
  }
  func.func @transform_7(%arg0: i32) -> (i32, i32) {
    %c0_i32 = arith.constant 0 : i32
    %c0_i32_0 = arith.constant 0 : i32
    return %arg0, %c0_i32 : i32, i32
  }
}

</mosaic_0001>

<llo_original>
// kernel: dqn_forward.1
$region0: #{dqn_forward.1}
  #allocation0 [shape = 'u32[]', space=smem, size = 0x4, offset = 0x4, fixed_abs, tag = 'smem constant byte address 0x4 - core index']
  #allocation1 [shape = 'u32[144,128]{1,0:T(1,128)}', space=vmem, size = 0x12000, scoped, tag = 'internal scratch']
  %s0 = inlined_call_operand.vmem [shape: f32[16,16], index: 0, kind: input, shape index: {}]
  %s1 = inlined_call_operand.vmem [shape: f32[16,64], index: 1, kind: input, shape index: {}]
  %s2 = inlined_call_operand.vmem [shape: f32[1,64], index: 2, kind: input, shape index: {}]
  %s3 = inlined_call_operand.hbm [shape: f32[64,64], index: 3, kind: input, shape index: {}]
  %s4 = inlined_call_operand.vmem [shape: f32[1,64], index: 4, kind: input, shape index: {}]
  %s5 = inlined_call_operand.hbm [shape: f32[64,128], index: 5, kind: input, shape index: {}]
  %s6 = inlined_call_operand.vmem [shape: f32[1,128], index: 6, kind: input, shape index: {}]
  %s7 = inlined_call_operand.vmem [shape: f32[16,128], index: 7, kind: output, shape index: {}]
  %s8 = sld [smem:[#allocation0]]
  $region46: #{dqn_forward.1} parent=0
    _
  %s10 = ssub.s32 1, %s8
  %s11 = scalar_select 0, %s10, %s8
  $region1: #{dqn_forward.1} parent=0
    #allocation2 [shape = 'u8[32768]{0}', space=vmem, size = 0x8000, scoped, tag = 'input window, operand 3, single buffered']
    #allocation3 [shape = 's32[1]{0}', space=sflag, size = 0x4, scoped, tag = 'scoped memory for dqn_forward.1']
    #allocation4 [shape = 'u8[32768]{0}', space=vmem, size = 0x8000, scoped, tag = 'input window, operand 5, single buffered']
    #allocation5 [shape = 's32[1]{0}', space=sflag, size = 0x4, scoped, tag = 'scoped memory for dqn_forward.1']
    %12 = vsyncpa [#allocation3], 0
    %13 = vsyncpa [#allocation5], 0
    // Predicated region
    $region2: #{dqn_forward.1} parent=1 // pred_check
      _
    $region3: #{dqn_forward.1} parent=1 // pred_check_branch
      %15 = sbr.rel (0) target = $region5
    $region4: #{dqn_forward.1} parent=1 // pred_region
      _
    $region5: #{dqn_forward.1} parent=1 // pred_fallthru
      _
    // Predicated region
    $region6: #{dqn_forward.1} parent=1 // pred_check
      _
    $region7: #{dqn_forward.1} parent=1 // pred_check_branch
      %17 = sbr.rel (0) target = $region9
    $region8: #{dqn_forward.1} parent=1 // pred_region
      _
    $region9: #{dqn_forward.1} parent=1 // pred_fallthru
      _
    // Predicated region
    $region10: #{dqn_forward.1} parent=1 // pred_check
      _
    $region11: #{dqn_forward.1} parent=1 // pred_check_branch
      %19 = sbr.rel (0) target = $region13
    $region12: #{dqn_forward.1} parent=1 // pred_region
      _
    $region13: #{dqn_forward.1} parent=1 // pred_fallthru
      _
    // Predicated region
    $region14: #{dqn_forward.1} parent=1 // pred_check
      _
    $region15: #{dqn_forward.1} parent=1 // pred_check_branch
      %21 = sbr.rel (0) target = $region17
    $region16: #{dqn_forward.1} parent=1 // pred_region
      %s23 = ssub.s32 1024, 1024
      %24 = vsyncadd [#allocation3], %s23
      %s25 = sshll.u32 [#allocation2], 4
      %s26 = int_to_ptr.vmem [resolvable:$true] %s25
      %31 = dma.hbm_to_vmem [thread:$0]  %s3, 1024, %s26, [#allocation3], 128, 128, 8
    $region17: #{dqn_forward.1} parent=1 // pred_fallthru
      _
    // Predicated region
    $region18: #{dqn_forward.1} parent=1 // pred_check
      _
    $region19: #{dqn_forward.1} parent=1 // pred_check_branch
      %33 = sbr.rel (0) target = $region21
    $region20: #{dqn_forward.1} parent=1 // pred_region
      _
    $region21: #{dqn_forward.1} parent=1 // pred_fallthru
      _
    // Predicated region
    $region22: #{dqn_forward.1} parent=1 // pred_check
      _
    $region23: #{dqn_forward.1} parent=1 // pred_check_branch
      %35 = sbr.rel (0) target = $region25
    $region24: #{dqn_forward.1} parent=1 // pred_region
      %s37 = ssub.s32 1024, 1024
      %38 = vsyncadd [#allocation5], %s37
      %s39 = sshll.u32 [#allocation4], 4
      %s40 = int_to_ptr.vmem [resolvable:$true] %s39
      %45 = dma.hbm_to_vmem [thread:$0]  %s5, 1024, %s40, [#allocation5], 128, 128, 8
    $region25: #{dqn_forward.1} parent=1 // pred_fallthru
      _
    // Predicated region
    $region26: #{dqn_forward.1} parent=1 // pred_check
      _
    $region27: #{dqn_forward.1} parent=1 // pred_check_branch
      %47 = sbr.rel (0) target = $region29
    $region28: #{dqn_forward.1} parent=1 // pred_region
      _
    $region29: #{dqn_forward.1} parent=1 // pred_fallthru
      _
    // Predicated region
    $region30: #{dqn_forward.1} parent=1 // pred_check
      _
    $region31: #{dqn_forward.1} parent=1 // pred_check_branch
      %49 = sbr.rel (0) target = $region33
    $region32: #{dqn_forward.1} parent=1 // pred_region
      %50 = dma.done [#allocation3], 1024
    $region33: #{dqn_forward.1} parent=1 // pred_fallthru
      _
    // Predicated region
    $region34: #{dqn_forward.1} parent=1 // pred_check
      _
    $region35: #{dqn_forward.1} parent=1 // pred_check_branch
      %52 = sbr.rel (0) target = $region37
    $region36: #{dqn_forward.1} parent=1 // pred_region
      %53 = dma.done [#allocation5], 1024
    $region37: #{dqn_forward.1} parent=1 // pred_fallthru
      _
    %v54 = vld [vmem:[%s1] sm:$0xff]
    %v55 = vld [vmem:[%s1 + $0x8] sm:$0xff]
    %v56 = vld [vmem:[%s0] sm:$0xff]
    %v57 = vld [vmem:[%s0 + $0x8] sm:$0xff]
    %v58 = vld [vmem:[%s2] sm:$0x1]
    %v60 = vlaneseq
    %v61 = vshrl.u32 %v60, 7
    %v62 = vsub.s32 0, %v61
    %v63 = vrot.slane %v58, %v62
    %vm65 = vcmask 130048
    %v67 = vsel %vm65, %v56, 0
    %v70 = vsel %vm65, %v57, 0
    %72 = vmatprep.subr.mxu0 0.0
    %73 = vmatpush1.msra.mxu0 0.0
    %74 = vmatprep.subr.mxu0 0.0
    %75 = vmatpush1.msra.mxu0 0.0
    %76 = vmatprep.subr.mxu0 0.0
    %77 = vmatpush1.msra.mxu0 0.0
    %78 = vmatprep.subr.mxu0 0.0
    %79 = vmatpush1.msra.mxu0 0.0
    %80 = vmatprep.subr.mxu0 0.0
    %81 = vmatpush1.msra.mxu0 0.0
    %82 = vmatprep.subr.mxu0 0.0
    %83 = vmatpush1.msra.mxu0 0.0
    %84 = vmatprep.subr.mxu0 0.0
    %85 = vmatpush1.msra.mxu0 0.0
    %86 = vmatprep.subr.mxu0 0.0
    %87 = vmatpush1.msra.mxu0 0.0
    %88 = vmatprep.subr.mxu0 0.0
    %89 = vmatpush1.msra.mxu0 0.0
    %90 = vmatprep.subr.mxu0 0.0
    %91 = vmatpush1.msra.mxu0 0.0
    %92 = vmatprep.subr.mxu0 0.0
    %93 = vmatpush1.msra.mxu0 0.0
    %94 = vmatprep.subr.mxu0 0.0
    %95 = vmatpush1.msra.mxu0 0.0
    %96 = vmatprep.subr.mxu0 0.0
    %97 = vmatpush1.msra.mxu0 0.0
    %98 = vmatprep.subr.mxu0 0.0
    %99 = vmatpush1.msra.mxu0 0.0
    %100 = vmatprep.subr.mxu0 0.0
    %101 = vmatpush1.msra.mxu0 %v55
    %102 = vmatprep.subr.mxu0 0.0
    %103 = vmatpush1.msra.mxu0 %v54
    %104 = vmatprep.subr.mxu0 0.0
    %105 = vmatpush2.msra.mxu0 0.0
    %106 = vmatprep.subr.mxu0 0.0
    %107 = vmatpush2.msra.mxu0 0.0
    %108 = vmatprep.subr.mxu0 0.0
    %109 = vmatpush2.msra.mxu0 0.0
    %110 = vmatprep.subr.mxu0 0.0
    %111 = vmatpush2.msra.mxu0 0.0
    %112 = vmatprep.subr.mxu0 0.0
    %113 = vmatpush2.msra.mxu0 0.0
    %114 = vmatprep.subr.mxu0 0.0
    %115 = vmatpush2.msra.mxu0 0.0
    %116 = vmatprep.subr.mxu0 0.0
    %117 = vmatpush2.msra.mxu0 0.0
    %118 = vmatprep.subr.mxu0 0.0
    %119 = vmatpush2.msra.mxu0 0.0
    %120 = vmatprep.subr.mxu0 0.0
    %121 = vmatpush2.msra.mxu0 0.0
    %122 = vmatprep.subr.mxu0 0.0
    %123 = vmatpush2.msra.mxu0 0.0
    %124 = vmatprep.subr.mxu0 0.0
    %125 = vmatpush2.msra.mxu0 0.0
    %126 = vmatprep.subr.mxu0 0.0
    %127 = vmatpush2.msra.mxu0 0.0
    %128 = vmatprep.subr.mxu0 0.0
    %129 = vmatpush2.msra.mxu0 0.0
    %130 = vmatprep.subr.mxu0 0.0
    %131 = vmatpush2.msra.mxu0 0.0
    %132 = vmatprep.subr.mxu0 0.0
    %133 = vmatpush2.msra.mxu0 0.0
    %134 = vmatprep.subr.mxu0 0.0
    %135 = vmatpush2.msra.mxu0 0.0
    %136 = vmatprep.mubr.f32.mxu0 0.0
    %137 = vmatmul.mubr.f32.gmra.mxu0 %v67
    %v138 = vpop.f32.mrf.mxu0
    %v139 = vadd.f32 %v63, %v138
    %v140 = vpop.f32.mrf.mxu0
    %141 = vmatprep.mubr.f32.mxu0 0.0
    %142 = vmatmul.mubr.f32.gmra.mxu0 %v70
    %v143 = vpop.f32.mrf.mxu0
    %v144 = vadd.f32 %v63, %v143
    %v145 = vpop.f32.mrf.mxu0
    %146 = vdwg.mxu0
    %v147 = vmax.f32 %v139, 0.0
    %v148 = vmax.f32 %v144, 0.0
    %v149 = vld [vmem:[#allocation2] sm:$0xff]
    %v150 = vld [vmem:[#allocation2 + $0x8] sm:$0xff]
    %v151 = vld [vmem:[#allocation2 + $0x10] sm:$0xff]
    %v152 = vld [vmem:[#allocation2 + $0x18] sm:$0xff]
    %v153 = vld [vmem:[#allocation2 + $0x20] sm:$0xff]
    %v154 = vld [vmem:[#allocation2 + $0x28] sm:$0xff]
    %v155 = vld [vmem:[#allocation2 + $0x30] sm:$0xff]
    %v156 = vld [vmem:[#allocation2 + $0x38] sm:$0xff]
    %v157 = vld [vmem:[%s4] sm:$0x1]
    %v159 = vlaneseq
    %v160 = vshrl.u32 %v159, 7
    %v161 = vsub.s32 0, %v160
    %v162 = vrot.slane %v157, %v161
    %vm164 = vcmask 523264
    %v166 = vsel %vm164, %v147, 0
    %v169 = vsel %vm164, %v148, 0
    %171 = vmatprep.subr.mxu0 0.0
    %172 = vmatpush1.msra.mxu0 0.0
    %173 = vmatprep.subr.mxu0 0.0
    %174 = vmatpush1.msra.mxu0 0.0
    %175 = vmatprep.subr.mxu0 0.0
    %176 = vmatpush1.msra.mxu0 0.0
    %177 = vmatprep.subr.mxu0 0.0
    %178 = vmatpush1.msra.mxu0 0.0
    %179 = vmatprep.subr.mxu0 0.0
    %180 = vmatpush1.msra.mxu0 0.0
    %181 = vmatprep.subr.mxu0 0.0
    %182 = vmatpush1.msra.mxu0 0.0
    %183 = vmatprep.subr.mxu0 0.0
    %184 = vmatpush1.msra.mxu0 0.0
    %185 = vmatprep.subr.mxu0 0.0
    %186 = vmatpush1.msra.mxu0 0.0
    %187 = vmatprep.subr.mxu0 0.0
    %188 = vmatpush1.msra.mxu0 %v156
    %189 = vmatprep.subr.mxu0 0.0
    %190 = vmatpush1.msra.mxu0 %v155
    %191 = vmatprep.subr.mxu0 0.0
    %192 = vmatpush1.msra.mxu0 %v154
    %193 = vmatprep.subr.mxu0 0.0
    %194 = vmatpush1.msra.mxu0 %v153
    %195 = vmatprep.subr.mxu0 0.0
    %196 = vmatpush1.msra.mxu0 %v152
    %197 = vmatprep.subr.mxu0 0.0
    %198 = vmatpush1.msra.mxu0 %v151
    %199 = vmatprep.subr.mxu0 0.0
    %200 = vmatpush1.msra.mxu0 %v150
    %201 = vmatprep.subr.mxu0 0.0
    %202 = vmatpush1.msra.mxu0 %v149
    %203 = vmatprep.subr.mxu0 0.0
    %204 = vmatpush2.msra.mxu0 0.0
    %205 = vmatprep.subr.mxu0 0.0
    %206 = vmatpush2.msra.mxu0 0.0
    %207 = vmatprep.subr.mxu0 0.0
    %208 = vmatpush2.msra.mxu0 0.0
    %209 = vmatprep.subr.mxu0 0.0
    %210 = vmatpush2.msra.mxu0 0.0
    %211 = vmatprep.subr.mxu0 0.0
    %212 = vmatpush2.msra.mxu0 0.0
    %213 = vmatprep.subr.mxu0 0.0
    %214 = vmatpush2.msra.mxu0 0.0
    %215 = vmatprep.subr.mxu0 0.0
    %216 = vmatpush2.msra.mxu0 0.0
    %217 = vmatprep.subr.mxu0 0.0
    %218 = vmatpush2.msra.mxu0 0.0
    %219 = vmatprep.subr.mxu0 0.0
    %220 = vmatpush2.msra.mxu0 0.0
    %221 = vmatprep.subr.mxu0 0.0
    %222 = vmatpush2.msra.mxu0 0.0
    %223 = vmatprep.subr.mxu0 0.0
    %224 = vmatpush2.msra.mxu0 0.0
    %225 = vmatprep.subr.mxu0 0.0
    %226 = vmatpush2.msra.mxu0 0.0
    %227 = vmatprep.subr.mxu0 0.0
    %228 = vmatpush2.msra.mxu0 0.0
    %229 = vmatprep.subr.mxu0 0.0
    %230 = vmatpush2.msra.mxu0 0.0
    %231 = vmatprep.subr.mxu0 0.0
    %232 = vmatpush2.msra.mxu0 0.0
    %233 = vmatprep.subr.mxu0 0.0
    %234 = vmatpush2.msra.mxu0 0.0
    %235 = vmatprep.mubr.f32.mxu0 0.0
    %236 = vmatmul.mubr.f32.gmra.mxu0 %v166
    %v237 = vpop.f32.mrf.mxu0
    %v238 = vadd.f32 %v162, %v237
    %v239 = vpop.f32.mrf.mxu0
    %240 = vmatprep.mubr.f32.mxu0 0.0
    %241 = vmatmul.mubr.f32.gmra.mxu0 %v169
    %v242 = vpop.f32.mrf.mxu0
    %v243 = vadd.f32 %v162, %v242
    %v244 = vpop.f32.mrf.mxu0
    %245 = vdwg.mxu0
    %v246 = vmax.f32 %v238, 0.0
    %v247 = vmax.f32 %v243, 0.0
    %v248 = vld [vmem:[#allocation4] sm:$0xff]
    %v249 = vld [vmem:[#allocation4 + $0x8] sm:$0xff]
    %v250 = vld [vmem:[#allocation4 + $0x10] sm:$0xff]
    %v251 = vld [vmem:[#allocation4 + $0x18] sm:$0xff]
    %v252 = vld [vmem:[#allocation4 + $0x20] sm:$0xff]
    %v253 = vld [vmem:[#allocation4 + $0x28] sm:$0xff]
    %v254 = vld [vmem:[#allocation4 + $0x30] sm:$0xff]
    %v255 = vld [vmem:[#allocation4 + $0x38] sm:$0xff]
    %v256 = vld [vmem:[%s6] sm:$0x1]
    %v258 = vlaneseq
    %v259 = vshrl.u32 %v258, 7
    %v260 = vsub.s32 0, %v259
    %v261 = vrot.slane %v256, %v260
    %v264 = vsel %vm164, %v246, 0
    %v267 = vsel %vm164, %v247, 0
    %269 = vmatprep.subr.mxu0 0.0
    %270 = vmatpush1.msra.mxu0 0.0
    %271 = vmatprep.subr.mxu0 0.0
    %272 = vmatpush1.msra.mxu0 0.0
    %273 = vmatprep.subr.mxu0 0.0
    %274 = vmatpush1.msra.mxu0 0.0
    %275 = vmatprep.subr.mxu0 0.0
    %276 = vmatpush1.msra.mxu0 0.0
    %277 = vmatprep.subr.mxu0 0.0
    %278 = vmatpush1.msra.mxu0 0.0
    %279 = vmatprep.subr.mxu0 0.0
    %280 = vmatpush1.msra.mxu0 0.0
    %281 = vmatprep.subr.mxu0 0.0
    %282 = vmatpush1.msra.mxu0 0.0
    %283 = vmatprep.subr.mxu0 0.0
    %284 = vmatpush1.msra.mxu0 0.0
    %285 = vmatprep.subr.mxu0 0.0
    %286 = vmatpush1.msra.mxu0 %v255
    %287 = vmatprep.subr.mxu0 0.0
    %288 = vmatpush1.msra.mxu0 %v254
    %289 = vmatprep.subr.mxu0 0.0
    %290 = vmatpush1.msra.mxu0 %v253
    %291 = vmatprep.subr.mxu0 0.0
    %292 = vmatpush1.msra.mxu0 %v252
    %293 = vmatprep.subr.mxu0 0.0
    %294 = vmatpush1.msra.mxu0 %v251
    %295 = vmatprep.subr.mxu0 0.0
    %296 = vmatpush1.msra.mxu0 %v250
    %297 = vmatprep.subr.mxu0 0.0
    %298 = vmatpush1.msra.mxu0 %v249
    %299 = vmatprep.subr.mxu0 0.0
    %300 = vmatpush1.msra.mxu0 %v248
    %301 = vmatprep.subr.mxu0 0.0
    %302 = vmatpush2.msra.mxu0 0.0
    %303 = vmatprep.subr.mxu0 0.0
    %304 = vmatpush2.msra.mxu0 0.0
    %305 = vmatprep.subr.mxu0 0.0
    %306 = vmatpush2.msra.mxu0 0.0
    %307 = vmatprep.subr.mxu0 0.0
    %308 = vmatpush2.msra.mxu0 0.0
    %309 = vmatprep.subr.mxu0 0.0
    %310 = vmatpush2.msra.mxu0 0.0
    %311 = vmatprep.subr.mxu0 0.0
    %312 = vmatpush2.msra.mxu0 0.0
    %313 = vmatprep.subr.mxu0 0.0
    %314 = vmatpush2.msra.mxu0 0.0
    %315 = vmatprep.subr.mxu0 0.0
    %316 = vmatpush2.msra.mxu0 0.0
    %317 = vmatprep.subr.mxu0 0.0
    %318 = vmatpush2.msra.mxu0 0.0
    %319 = vmatprep.subr.mxu0 0.0
    %320 = vmatpush2.msra.mxu0 0.0
    %321 = vmatprep.subr.mxu0 0.0
    %322 = vmatpush2.msra.mxu0 0.0
    %323 = vmatprep.subr.mxu0 0.0
    %324 = vmatpush2.msra.mxu0 0.0
    %325 = vmatprep.subr.mxu0 0.0
    %326 = vmatpush2.msra.mxu0 0.0
    %327 = vmatprep.subr.mxu0 0.0
    %328 = vmatpush2.msra.mxu0 0.0
    %329 = vmatprep.subr.mxu0 0.0
    %330 = vmatpush2.msra.mxu0 0.0
    %331 = vmatprep.subr.mxu0 0.0
    %332 = vmatpush2.msra.mxu0 0.0
    %333 = vmatprep.mubr.f32.mxu0 0.0
    %334 = vmatmul.mubr.f32.gmra.mxu0 %v264
    %v335 = vpop.f32.mrf.mxu0
    %v336 = vadd.f32 %v261, %v335
    %v337 = vpop.f32.mrf.mxu0
    %338 = vmatprep.mubr.f32.mxu0 0.0
    %339 = vmatmul.mubr.f32.gmra.mxu0 %v267
    %v340 = vpop.f32.mrf.mxu0
    %v341 = vadd.f32 %v261, %v340
    %v342 = vpop.f32.mrf.mxu0
    %343 = vdwg.mxu0
    %v344 = vmax.f32 %v336, 0.0
    %v345 = vmax.f32 %v341, 0.0
    %346 = vst [vmem:[%s7] sm:$0xff] %v344
    %347 = vst [vmem:[%s7 + $0x8] sm:$0xff] %v345
    // Predicated region
    $region38: #{dqn_forward.1} parent=1 // pred_check
      _
    $region39: #{dqn_forward.1} parent=1 // pred_check_branch
      %349 = sbr.rel (0) target = $region41
    $region40: #{dqn_forward.1} parent=1 // pred_region
      _
    $region41: #{dqn_forward.1} parent=1 // pred_fallthru
      _
    // Predicated region
    $region42: #{dqn_forward.1} parent=1 // pred_check
      _
    $region43: #{dqn_forward.1} parent=1 // pred_check_branch
      %351 = sbr.rel (0) target = $region45
    $region44: #{dqn_forward.1} parent=1 // pred_region
      _
    $region45: #{dqn_forward.1} parent=1 // pred_fallthru
      _
    %352 = vsyncpa [#allocation3], 1
    %353 = vsyncpa [#allocation5], 1

</llo_original>
